<compile_context>
chip_gen: v5e
topology: v5e:2x2
jax: 0.10.0
libtpu: 0.0.40
codegen_flags: <defaults>
</compile_context>

<pallas_src>
import functools
import math

import jax
import jax.numpy as jnp
from jax.experimental import pallas as pl
from jax.experimental.pallas import tpu as pltpu


def _pick_row_tile(HO, WO):
    """Smallest output-row tile TH such that TH*WO is a multiple of 128 lanes
    and TH divides HO with at least 2 tiles; otherwise the whole height."""
    th = math.lcm(max(WO, 1), 128) // max(WO, 1)
    if th < HO and HO % th == 0:
        return th
    return HO


def _flatten_rows(win, TH, WO):
    """(C, TH, WO) -> (C, TH*WO) via static row slices + one lane concat.

    Avoids a direct minor-dims reshape (layout relayout) inside the kernel;
    slice + concatenate lower to plain layout ops on TPU.
    """
    if TH == 1:
        return win[:, 0, :]
    rows = [win[:, t, :] for t in range(TH)]
    return jnp.concatenate(rows, axis=-1)


def _conv_kernel(x_ref, w_ref, b_ref, o_ref, xpad_ref, *,
                 KH, KW, TH, WO, eph, epw, dh, dw):
    # x_ref   : (1, Cin, H, W)       raw NCHW input block (one sample)
    # w_ref   : (Cout, KH*KW*Cin)    pre-flattened weight slab (kh, kw, ci order)
    # b_ref   : (Cout, 1)
    # o_ref   : (1, Cout, TH*WO)     lane-dense output tile (flattened pixels)
    # xpad_ref: (Cin, Hp, Wp)        zero-padded image scratch (persists over ht)
    ht = pl.program_id(1)
    cin, H, W = x_ref.shape[1], x_ref.shape[2], x_ref.shape[3]

    # Build the zero-padded image once per sample. The row-tile axis is the
    # innermost ("arbitrary") grid axis and the input block index is constant
    # over it, so the input is DMA'd once per sample and the scratch is reused.
    @pl.when(ht == 0)
    def _fill_padded():
        xpad_ref[...] = jnp.zeros_like(xpad_ref)
        xpad_ref[:, eph:eph + H, epw:epw + W] = x_ref[0]

    h0 = pl.multiple_of(ht * TH, TH)  # first output row of this tile (stride 1)

    # im2col: gather the KH*KW shifted windows for this row tile and fuse the
    # (kh, kw, ci) taps into a single contraction axis of size KH*KW*Cin.
    taps = []
    for kh in range(KH):
        for kw in range(KW):
            win = xpad_ref[:, pl.ds(h0 + kh * dh, TH), kw * dw:kw * dw + WO]
            taps.append(_flatten_rows(win, TH, WO))        # (Cin, TH*WO)
    patches = jnp.concatenate(taps, axis=0)                # (KH*KW*Cin, TH*WO)

    # Single MXU matmul with a lane-dense N dimension, f32 accumulation.
    acc = jnp.dot(w_ref[...], patches, preferred_element_type=jnp.float32)
    acc = acc + b_ref[...]                                 # (Cout, 1) broadcast
    o_ref[0] = acc.astype(o_ref.dtype)


def cube_sphere_conv2d_single_panel(x_nchw, eq_weight_oihw, eq_bias, *,
                                    stride=(1, 1), padding=(0, 0),
                                    dilation=(1, 1)):
    N, Cin, H, W = x_nchw.shape
    Cout, Cin_w, KH, KW = eq_weight_oihw.shape
    assert Cin == Cin_w
    # TODO(synk): stride > 1 (strided window extraction) is not implemented;
    # the module default and the demo use stride = 1.
    assert stride == (1, 1), "only stride=(1,1) is supported by this kernel"

    dh, dw = dilation
    # Effective padding = explicit padding + the hard-coded padding=1 in F.conv2d.
    eph, epw = padding[0] + 1, padding[1] + 1
    Hp, Wp = H + 2 * eph, W + 2 * epw
    HO = (H + 2 * eph - dh * (KH - 1) - 1) // stride[0] + 1
    WO = (W + 2 * epw - dw * (KW - 1) - 1) // stride[1] + 1

    TH = _pick_row_tile(HO, WO)          # output rows per grid step
    HT = HO // TH

    # Weight flattened once to (Cout, KH*KW*Cin) with K ordered (kh, kw, ci)
    # to match the kernel's im2col order; bias as (Cout, 1) for broadcasting.
    K = KH * KW * Cin
    w2d = jnp.transpose(eq_weight_oihw, (0, 2, 3, 1)).reshape(Cout, K)
    b2d = eq_bias.reshape(Cout, 1)

    kernel = functools.partial(_conv_kernel, KH=KH, KW=KW, TH=TH, WO=WO,
                               eph=eph, epw=epw, dh=dh, dw=dw)

    out_flat = pl.pallas_call(
        kernel,
        out_shape=jax.ShapeDtypeStruct((N, Cout, HO * WO), x_nchw.dtype),
        grid_spec=pltpu.PrefetchScalarGridSpec(
            num_scalar_prefetch=0,
            grid=(N, HT),
            in_specs=[
                pl.BlockSpec((1, Cin, H, W), lambda n, t: (n, 0, 0, 0)),
                pl.BlockSpec((Cout, K), lambda n, t: (0, 0)),
                pl.BlockSpec((Cout, 1), lambda n, t: (0, 0)),
            ],
            out_specs=pl.BlockSpec((1, Cout, TH * WO), lambda n, t: (n, 0, t)),
            scratch_shapes=[pltpu.VMEM((Cin, Hp, Wp), x_nchw.dtype)],
        ),
        compiler_params=pltpu.CompilerParams(
            dimension_semantics=("parallel", "arbitrary"),
            vmem_limit_bytes=16 * 1024 * 1024),
    )(x_nchw, w2d, b2d)

    # Metadata-only reshape back to NCHW (no transpose, no extra HBM traffic).
    return out_flat.reshape(N, Cout, HO, WO)


if __name__ == "__main__":
    # Module config (small): in_channels=4, out_channels=8, kernel_size=3,
    # stride=1, padding=0, dilation=1, bias=True, padding_mode='zeros'.
    N, Cin, H, W = 2, 4, 16, 16
    Cout, KH, KW = 8, 3, 3
    stride, padding, dilation = (1, 1), (0, 0), (1, 1)

    key = jax.random.PRNGKey(0)
    kx, kw_eq, kb_eq, kw_po, kb_po = jax.random.split(key, 5)

    # Deterministic init mirroring reset_parameters() distributions:
    # kaiming_uniform_(a=sqrt(5)) / bias -> U(-1/sqrt(fan_in), 1/sqrt(fan_in)).
    fan_in = Cin * KH * KW
    bound = 1.0 / math.sqrt(fan_in)
    equatorial_weight = jax.random.uniform(
        kw_eq, (Cout, Cin, KH, KW), jnp.float32, -bound, bound)
    equatorial_bias = jax.random.uniform(
        kb_eq, (Cout,), jnp.float32, -bound, bound)
    # Polar params exist on the module but are NOT used by forward().
    polar_weight = jax.random.uniform(
        kw_po, (Cout, Cin, KH, KW), jnp.float32, -bound, bound)
    polar_bias = jax.random.uniform(
        kb_po, (Cout,), jnp.float32, -bound, bound)

    x = jax.random.normal(kx, (N, Cin, H, W), jnp.float32)

    out = cube_sphere_conv2d_single_panel(
        x, equatorial_weight, equatorial_bias,
        stride=stride, padding=padding, dilation=dilation)
    out = jax.block_until_ready(out)

    # Pure-JAX reference (XLA conv) for correctness.
    ref = jax.lax.conv_general_dilated(
        x, equatorial_weight,
        window_strides=stride,
        padding=((padding[0] + 1, padding[0] + 1),
                 (padding[1] + 1, padding[1] + 1)),
        rhs_dilation=dilation,
        dimension_numbers=("NCHW", "OIHW", "NCHW"),
    ) + equatorial_bias[None, :, None, None]

    assert out.shape == ref.shape == (N, Cout, H, W)
    assert jnp.allclose(out, ref, atol=1e-4, rtol=1e-4)
    print("KERNEL_OK")
</pallas_src>

<mosaic_0001>
module attributes {stable_mosaic.version = 11 : i64} {
  func.func @_conv_kernel(%arg0: i32, %arg1: i32, %arg2: memref<1x4x16x16xf32, #tpu.memory_space<vmem>>, %arg3: memref<8x36xf32, #tpu.memory_space<vmem>>, %arg4: memref<8x1xf32, #tpu.memory_space<vmem>>, %arg5: memref<1x8x128xf32, #tpu.memory_space<vmem>>, %arg6: memref<4x18x18xf32, #tpu.memory_space<vmem>>) attributes {dimension_semantics = [#tpu.dimension_semantics<parallel>, #tpu.dimension_semantics<arbitrary>], iteration_bounds = array<i64: 2, 2>, scalar_prefetch = 0 : i64, scratch_operands = 1 : i64, tpu.core_type = #tpu.core_type<tc>, window_params = [{transform_indices = @transform_0, window_bounds = array<i64: 1, 4, 16, 16>}, {pipeline_mode = #tpu.pipeline_mode<synchronous>, transform_indices = @transform_1, window_bounds = array<i64: 8, 36>}, {pipeline_mode = #tpu.pipeline_mode<synchronous>, transform_indices = @transform_2, window_bounds = array<i64: 8, 1>}, {transform_indices = @transform_3, window_bounds = array<i64: 1, 8, 128>}]} {
    %c0_i32 = arith.constant 0 : i32
    %0 = arith.cmpi eq, %arg1, %c0_i32 : i32
    %1 = arith.extui %0 : i1 to i32
    %c0_i32_0 = arith.constant 0 : i32
    %2 = arith.cmpi ne, %1, %c0_i32_0 : i32
    scf.if %2 {
      %cst_30 = arith.constant 0.000000e+00 : f32
      %194 = vector.broadcast %cst_30 : f32 to vector<4x18x18xf32>
      %c0_31 = arith.constant 0 : index
      %c0_32 = arith.constant 0 : index
      %c0_33 = arith.constant 0 : index
      %195 = vector.load %arg6[%c0_31, %c0_32, %c0_33] : memref<4x18x18xf32, #tpu.memory_space<vmem>>, vector<4x18x18xf32>
      tpu.vector_store %arg6[%c0_31, %c0_32, %c0_33], %194 {strides = array<i32>} : memref<4x18x18xf32, #tpu.memory_space<vmem>>, vector<4x18x18xf32>,
      %c0_34 = arith.constant 0 : index
      %c0_35 = arith.constant 0 : index
      %c0_36 = arith.constant 0 : index
      %c0_37 = arith.constant 0 : index
      %196 = vector.load %arg2[%c0_34, %c0_35, %c0_36, %c0_37] : memref<1x4x16x16xf32, #tpu.memory_space<vmem>>, vector<1x4x16x16xf32>
      %197 = vector.shape_cast %196 : vector<1x4x16x16xf32> to vector<4x16x16xf32>
      %c0_38 = arith.constant 0 : index
      %c1_39 = arith.constant 1 : index
      %c1_40 = arith.constant 1 : index
      %198 = vector.load %arg6[%c0_38, %c1_39, %c1_40] : memref<4x18x18xf32, #tpu.memory_space<vmem>>, vector<4x16x16xf32>
      tpu.vector_store %arg6[%c0_38, %c1_39, %c1_40], %197 {strides = array<i32>} : memref<4x18x18xf32, #tpu.memory_space<vmem>>, vector<4x16x16xf32>,
    } else {
    }
    %c8_i32 = arith.constant 8 : i32
    %3 = arith.muli %arg1, %c8_i32 : i32
    %4 = tpu.assume_multiple %3, 8 : i32
    %c0_i32_1 = arith.constant 0 : i32
    %5 = arith.addi %4, %c0_i32_1 : i32
    %c0 = arith.constant 0 : index
    %6 = arith.index_cast %5 : i32 to index
    %c0_2 = arith.constant 0 : index
    %7 = vector.load %arg6[%c0, %6, %c0_2] : memref<4x18x18xf32, #tpu.memory_space<vmem>>, vector<4x8x16xf32>
    %8 = vector.extract_strided_slice %7 {offsets = [0, 0, 0], sizes = [4, 1, 16], strides = [1, 1, 1]} : vector<4x8x16xf32> to vector<4x1x16xf32>
    %9 = vector.shape_cast %8 : vector<4x1x16xf32> to vector<4x16xf32>
    %10 = vector.extract_strided_slice %7 {offsets = [0, 1, 0], sizes = [4, 1, 16], strides = [1, 1, 1]} : vector<4x8x16xf32> to vector<4x1x16xf32>
    %11 = vector.shape_cast %10 : vector<4x1x16xf32> to vector<4x16xf32>
    %12 = vector.extract_strided_slice %7 {offsets = [0, 2, 0], sizes = [4, 1, 16], strides = [1, 1, 1]} : vector<4x8x16xf32> to vector<4x1x16xf32>
    %13 = vector.shape_cast %12 : vector<4x1x16xf32> to vector<4x16xf32>
    %14 = vector.extract_strided_slice %7 {offsets = [0, 3, 0], sizes = [4, 1, 16], strides = [1, 1, 1]} : vector<4x8x16xf32> to vector<4x1x16xf32>
    %15 = vector.shape_cast %14 : vector<4x1x16xf32> to vector<4x16xf32>
    %16 = vector.extract_strided_slice %7 {offsets = [0, 4, 0], sizes = [4, 1, 16], strides = [1, 1, 1]} : vector<4x8x16xf32> to vector<4x1x16xf32>
    %17 = vector.shape_cast %16 : vector<4x1x16xf32> to vector<4x16xf32>
    %18 = vector.extract_strided_slice %7 {offsets = [0, 5, 0], sizes = [4, 1, 16], strides = [1, 1, 1]} : vector<4x8x16xf32> to vector<4x1x16xf32>
    %19 = vector.shape_cast %18 : vector<4x1x16xf32> to vector<4x16xf32>
    %20 = vector.extract_strided_slice %7 {offsets = [0, 6, 0], sizes = [4, 1, 16], strides = [1, 1, 1]} : vector<4x8x16xf32> to vector<4x1x16xf32>
    %21 = vector.shape_cast %20 : vector<4x1x16xf32> to vector<4x16xf32>
    %22 = vector.extract_strided_slice %7 {offsets = [0, 7, 0], sizes = [4, 1, 16], strides = [1, 1, 1]} : vector<4x8x16xf32> to vector<4x1x16xf32>
    %23 = vector.shape_cast %22 : vector<4x1x16xf32> to vector<4x16xf32>
    %24 = tpu.concatenate %9, %11, %13, %15, %17, %19, %21, %23 in 1 : vector<4x16xf32>, vector<4x16xf32>, vector<4x16xf32>, vector<4x16xf32>, vector<4x16xf32>, vector<4x16xf32>, vector<4x16xf32>, vector<4x16xf32> -> vector<4x128xf32>
    %c0_i32_3 = arith.constant 0 : i32
    %25 = arith.addi %4, %c0_i32_3 : i32
    %c0_4 = arith.constant 0 : index
    %26 = arith.index_cast %25 : i32 to index
    %c1 = arith.constant 1 : index
    %27 = vector.load %arg6[%c0_4, %26, %c1] : memref<4x18x18xf32, #tpu.memory_space<vmem>>, vector<4x8x16xf32>
    %28 = vector.extract_strided_slice %27 {offsets = [0, 0, 0], sizes = [4, 1, 16], strides = [1, 1, 1]} : vector<4x8x16xf32> to vector<4x1x16xf32>
    %29 = vector.shape_cast %28 : vector<4x1x16xf32> to vector<4x16xf32>
    %30 = vector.extract_strided_slice %27 {offsets = [0, 1, 0], sizes = [4, 1, 16], strides = [1, 1, 1]} : vector<4x8x16xf32> to vector<4x1x16xf32>
    %31 = vector.shape_cast %30 : vector<4x1x16xf32> to vector<4x16xf32>
    %32 = vector.extract_strided_slice %27 {offsets = [0, 2, 0], sizes = [4, 1, 16], strides = [1, 1, 1]} : vector<4x8x16xf32> to vector<4x1x16xf32>
    %33 = vector.shape_cast %32 : vector<4x1x16xf32> to vector<4x16xf32>
    %34 = vector.extract_strided_slice %27 {offsets = [0, 3, 0], sizes = [4, 1, 16], strides = [1, 1, 1]} : vector<4x8x16xf32> to vector<4x1x16xf32>
    %35 = vector.shape_cast %34 : vector<4x1x16xf32> to vector<4x16xf32>
    %36 = vector.extract_strided_slice %27 {offsets = [0, 4, 0], sizes = [4, 1, 16], strides = [1, 1, 1]} : vector<4x8x16xf32> to vector<4x1x16xf32>
    %37 = vector.shape_cast %36 : vector<4x1x16xf32> to vector<4x16xf32>
    %38 = vector.extract_strided_slice %27 {offsets = [0, 5, 0], sizes = [4, 1, 16], strides = [1, 1, 1]} : vector<4x8x16xf32> to vector<4x1x16xf32>
    %39 = vector.shape_cast %38 : vector<4x1x16xf32> to vector<4x16xf32>
    %40 = vector.extract_strided_slice %27 {offsets = [0, 6, 0], sizes = [4, 1, 16], strides = [1, 1, 1]} : vector<4x8x16xf32> to vector<4x1x16xf32>
    %41 = vector.shape_cast %40 : vector<4x1x16xf32> to vector<4x16xf32>
    %42 = vector.extract_strided_slice %27 {offsets = [0, 7, 0], sizes = [4, 1, 16], strides = [1, 1, 1]} : vector<4x8x16xf32> to vector<4x1x16xf32>
    %43 = vector.shape_cast %42 : vector<4x1x16xf32> to vector<4x16xf32>
    %44 = tpu.concatenate %29, %31, %33, %35, %37, %39, %41, %43 in 1 : vector<4x16xf32>, vector<4x16xf32>, vector<4x16xf32>, vector<4x16xf32>, vector<4x16xf32>, vector<4x16xf32>, vector<4x16xf32>, vector<4x16xf32> -> vector<4x128xf32>
    %c0_i32_5 = arith.constant 0 : i32
    %45 = arith.addi %4, %c0_i32_5 : i32
    %c0_6 = arith.constant 0 : index
    %46 = arith.index_cast %45 : i32 to index
    %c2 = arith.constant 2 : index
    %47 = vector.load %arg6[%c0_6, %46, %c2] : memref<4x18x18xf32, #tpu.memory_space<vmem>>, vector<4x8x16xf32>
    %48 = vector.extract_strided_slice %47 {offsets = [0, 0, 0], sizes = [4, 1, 16], strides = [1, 1, 1]} : vector<4x8x16xf32> to vector<4x1x16xf32>
    %49 = vector.shape_cast %48 : vector<4x1x16xf32> to vector<4x16xf32>
    %50 = vector.extract_strided_slice %47 {offsets = [0, 1, 0], sizes = [4, 1, 16], strides = [1, 1, 1]} : vector<4x8x16xf32> to vector<4x1x16xf32>
    %51 = vector.shape_cast %50 : vector<4x1x16xf32> to vector<4x16xf32>
    %52 = vector.extract_strided_slice %47 {offsets = [0, 2, 0], sizes = [4, 1, 16], strides = [1, 1, 1]} : vector<4x8x16xf32> to vector<4x1x16xf32>
    %53 = vector.shape_cast %52 : vector<4x1x16xf32> to vector<4x16xf32>
    %54 = vector.extract_strided_slice %47 {offsets = [0, 3, 0], sizes = [4, 1, 16], strides = [1, 1, 1]} : vector<4x8x16xf32> to vector<4x1x16xf32>
    %55 = vector.shape_cast %54 : vector<4x1x16xf32> to vector<4x16xf32>
    %56 = vector.extract_strided_slice %47 {offsets = [0, 4, 0], sizes = [4, 1, 16], strides = [1, 1, 1]} : vector<4x8x16xf32> to vector<4x1x16xf32>
    %57 = vector.shape_cast %56 : vector<4x1x16xf32> to vector<4x16xf32>
    %58 = vector.extract_strided_slice %47 {offsets = [0, 5, 0], sizes = [4, 1, 16], strides = [1, 1, 1]} : vector<4x8x16xf32> to vector<4x1x16xf32>
    %59 = vector.shape_cast %58 : vector<4x1x16xf32> to vector<4x16xf32>
    %60 = vector.extract_strided_slice %47 {offsets = [0, 6, 0], sizes = [4, 1, 16], strides = [1, 1, 1]} : vector<4x8x16xf32> to vector<4x1x16xf32>
    %61 = vector.shape_cast %60 : vector<4x1x16xf32> to vector<4x16xf32>
    %62 = vector.extract_strided_slice %47 {offsets = [0, 7, 0], sizes = [4, 1, 16], strides = [1, 1, 1]} : vector<4x8x16xf32> to vector<4x1x16xf32>
    %63 = vector.shape_cast %62 : vector<4x1x16xf32> to vector<4x16xf32>
    %64 = tpu.concatenate %49, %51, %53, %55, %57, %59, %61, %63 in 1 : vector<4x16xf32>, vector<4x16xf32>, vector<4x16xf32>, vector<4x16xf32>, vector<4x16xf32>, vector<4x16xf32>, vector<4x16xf32>, vector<4x16xf32> -> vector<4x128xf32>
    %c1_i32 = arith.constant 1 : i32
    %65 = arith.addi %4, %c1_i32 : i32
    %c0_7 = arith.constant 0 : index
    %66 = arith.index_cast %65 : i32 to index
    %c0_8 = arith.constant 0 : index
    %67 = vector.load %arg6[%c0_7, %66, %c0_8] : memref<4x18x18xf32, #tpu.memory_space<vmem>>, vector<4x8x16xf32>
    %68 = vector.extract_strided_slice %67 {offsets = [0, 0, 0], sizes = [4, 1, 16], strides = [1, 1, 1]} : vector<4x8x16xf32> to vector<4x1x16xf32>
    %69 = vector.shape_cast %68 : vector<4x1x16xf32> to vector<4x16xf32>
    %70 = vector.extract_strided_slice %67 {offsets = [0, 1, 0], sizes = [4, 1, 16], strides = [1, 1, 1]} : vector<4x8x16xf32> to vector<4x1x16xf32>
    %71 = vector.shape_cast %70 : vector<4x1x16xf32> to vector<4x16xf32>
    %72 = vector.extract_strided_slice %67 {offsets = [0, 2, 0], sizes = [4, 1, 16], strides = [1, 1, 1]} : vector<4x8x16xf32> to vector<4x1x16xf32>
    %73 = vector.shape_cast %72 : vector<4x1x16xf32> to vector<4x16xf32>
    %74 = vector.extract_strided_slice %67 {offsets = [0, 3, 0], sizes = [4, 1, 16], strides = [1, 1, 1]} : vector<4x8x16xf32> to vector<4x1x16xf32>
    %75 = vector.shape_cast %74 : vector<4x1x16xf32> to vector<4x16xf32>
    %76 = vector.extract_strided_slice %67 {offsets = [0, 4, 0], sizes = [4, 1, 16], strides = [1, 1, 1]} : vector<4x8x16xf32> to vector<4x1x16xf32>
    %77 = vector.shape_cast %76 : vector<4x1x16xf32> to vector<4x16xf32>
    %78 = vector.extract_strided_slice %67 {offsets = [0, 5, 0], sizes = [4, 1, 16], strides = [1, 1, 1]} : vector<4x8x16xf32> to vector<4x1x16xf32>
    %79 = vector.shape_cast %78 : vector<4x1x16xf32> to vector<4x16xf32>
    %80 = vector.extract_strided_slice %67 {offsets = [0, 6, 0], sizes = [4, 1, 16], strides = [1, 1, 1]} : vector<4x8x16xf32> to vector<4x1x16xf32>
    %81 = vector.shape_cast %80 : vector<4x1x16xf32> to vector<4x16xf32>
    %82 = vector.extract_strided_slice %67 {offsets = [0, 7, 0], sizes = [4, 1, 16], strides = [1, 1, 1]} : vector<4x8x16xf32> to vector<4x1x16xf32>
    %83 = vector.shape_cast %82 : vector<4x1x16xf32> to vector<4x16xf32>
    %84 = tpu.concatenate %69, %71, %73, %75, %77, %79, %81, %83 in 1 : vector<4x16xf32>, vector<4x16xf32>, vector<4x16xf32>, vector<4x16xf32>, vector<4x16xf32>, vector<4x16xf32>, vector<4x16xf32>, vector<4x16xf32> -> vector<4x128xf32>
    %c1_i32_9 = arith.constant 1 : i32
    %85 = arith.addi %4, %c1_i32_9 : i32
    %c0_10 = arith.constant 0 : index
    %86 = arith.index_cast %85 : i32 to index
    %c1_11 = arith.constant 1 : index
    %87 = vector.load %arg6[%c0_10, %86, %c1_11] : memref<4x18x18xf32, #tpu.memory_space<vmem>>, vector<4x8x16xf32>
    %88 = vector.extract_strided_slice %87 {offsets = [0, 0, 0], sizes = [4, 1, 16], strides = [1, 1, 1]} : vector<4x8x16xf32> to vector<4x1x16xf32>
    %89 = vector.shape_cast %88 : vector<4x1x16xf32> to vector<4x16xf32>
    %90 = vector.extract_strided_slice %87 {offsets = [0, 1, 0], sizes = [4, 1, 16], strides = [1, 1, 1]} : vector<4x8x16xf32> to vector<4x1x16xf32>
    %91 = vector.shape_cast %90 : vector<4x1x16xf32> to vector<4x16xf32>
    %92 = vector.extract_strided_slice %87 {offsets = [0, 2, 0], sizes = [4, 1, 16], strides = [1, 1, 1]} : vector<4x8x16xf32> to vector<4x1x16xf32>
    %93 = vector.shape_cast %92 : vector<4x1x16xf32> to vector<4x16xf32>
    %94 = vector.extract_strided_slice %87 {offsets = [0, 3, 0], sizes = [4, 1, 16], strides = [1, 1, 1]} : vector<4x8x16xf32> to vector<4x1x16xf32>
    %95 = vector.shape_cast %94 : vector<4x1x16xf32> to vector<4x16xf32>
    %96 = vector.extract_strided_slice %87 {offsets = [0, 4, 0], sizes = [4, 1, 16], strides = [1, 1, 1]} : vector<4x8x16xf32> to vector<4x1x16xf32>
    %97 = vector.shape_cast %96 : vector<4x1x16xf32> to vector<4x16xf32>
    %98 = vector.extract_strided_slice %87 {offsets = [0, 5, 0], sizes = [4, 1, 16], strides = [1, 1, 1]} : vector<4x8x16xf32> to vector<4x1x16xf32>
    %99 = vector.shape_cast %98 : vector<4x1x16xf32> to vector<4x16xf32>
    %100 = vector.extract_strided_slice %87 {offsets = [0, 6, 0], sizes = [4, 1, 16], strides = [1, 1, 1]} : vector<4x8x16xf32> to vector<4x1x16xf32>
    %101 = vector.shape_cast %100 : vector<4x1x16xf32> to vector<4x16xf32>
    %102 = vector.extract_strided_slice %87 {offsets = [0, 7, 0], sizes = [4, 1, 16], strides = [1, 1, 1]} : vector<4x8x16xf32> to vector<4x1x16xf32>
    %103 = vector.shape_cast %102 : vector<4x1x16xf32> to vector<4x16xf32>
    %104 = tpu.concatenate %89, %91, %93, %95, %97, %99, %101, %103 in 1 : vector<4x16xf32>, vector<4x16xf32>, vector<4x16xf32>, vector<4x16xf32>, vector<4x16xf32>, vector<4x16xf32>, vector<4x16xf32>, vector<4x16xf32> -> vector<4x128xf32>
    %c1_i32_12 = arith.constant 1 : i32
    %105 = arith.addi %4, %c1_i32_12 : i32
    %c0_13 = arith.constant 0 : index
    %106 = arith.index_cast %105 : i32 to index
    %c2_14 = arith.constant 2 : index
    %107 = vector.load %arg6[%c0_13, %106, %c2_14] : memref<4x18x18xf32, #tpu.memory_space<vmem>>, vector<4x8x16xf32>
    %108 = vector.extract_strided_slice %107 {offsets = [0, 0, 0], sizes = [4, 1, 16], strides = [1, 1, 1]} : vector<4x8x16xf32> to vector<4x1x16xf32>
    %109 = vector.shape_cast %108 : vector<4x1x16xf32> to vector<4x16xf32>
    %110 = vector.extract_strided_slice %107 {offsets = [0, 1, 0], sizes = [4, 1, 16], strides = [1, 1, 1]} : vector<4x8x16xf32> to vector<4x1x16xf32>
    %111 = vector.shape_cast %110 : vector<4x1x16xf32> to vector<4x16xf32>
    %112 = vector.extract_strided_slice %107 {offsets = [0, 2, 0], sizes = [4, 1, 16], strides = [1, 1, 1]} : vector<4x8x16xf32> to vector<4x1x16xf32>
    %113 = vector.shape_cast %112 : vector<4x1x16xf32> to vector<4x16xf32>
    %114 = vector.extract_strided_slice %107 {offsets = [0, 3, 0], sizes = [4, 1, 16], strides = [1, 1, 1]} : vector<4x8x16xf32> to vector<4x1x16xf32>
    %115 = vector.shape_cast %114 : vector<4x1x16xf32> to vector<4x16xf32>
    %116 = vector.extract_strided_slice %107 {offsets = [0, 4, 0], sizes = [4, 1, 16], strides = [1, 1, 1]} : vector<4x8x16xf32> to vector<4x1x16xf32>
    %117 = vector.shape_cast %116 : vector<4x1x16xf32> to vector<4x16xf32>
    %118 = vector.extract_strided_slice %107 {offsets = [0, 5, 0], sizes = [4, 1, 16], strides = [1, 1, 1]} : vector<4x8x16xf32> to vector<4x1x16xf32>
    %119 = vector.shape_cast %118 : vector<4x1x16xf32> to vector<4x16xf32>
    %120 = vector.extract_strided_slice %107 {offsets = [0, 6, 0], sizes = [4, 1, 16], strides = [1, 1, 1]} : vector<4x8x16xf32> to vector<4x1x16xf32>
    %121 = vector.shape_cast %120 : vector<4x1x16xf32> to vector<4x16xf32>
    %122 = vector.extract_strided_slice %107 {offsets = [0, 7, 0], sizes = [4, 1, 16], strides = [1, 1, 1]} : vector<4x8x16xf32> to vector<4x1x16xf32>
    %123 = vector.shape_cast %122 : vector<4x1x16xf32> to vector<4x16xf32>
    %124 = tpu.concatenate %109, %111, %113, %115, %117, %119, %121, %123 in 1 : vector<4x16xf32>, vector<4x16xf32>, vector<4x16xf32>, vector<4x16xf32>, vector<4x16xf32>, vector<4x16xf32>, vector<4x16xf32>, vector<4x16xf32> -> vector<4x128xf32>
    %c2_i32 = arith.constant 2 : i32
    %125 = arith.addi %4, %c2_i32 : i32
    %c0_15 = arith.constant 0 : index
    %126 = arith.index_cast %125 : i32 to index
    %c0_16 = arith.constant 0 : index
    %127 = vector.load %arg6[%c0_15, %126, %c0_16] : memref<4x18x18xf32, #tpu.memory_space<vmem>>, vector<4x8x16xf32>
    %128 = vector.extract_strided_slice %127 {offsets = [0, 0, 0], sizes = [4, 1, 16], strides = [1, 1, 1]} : vector<4x8x16xf32> to vector<4x1x16xf32>
    %129 = vector.shape_cast %128 : vector<4x1x16xf32> to vector<4x16xf32>
    %130 = vector.extract_strided_slice %127 {offsets = [0, 1, 0], sizes = [4, 1, 16], strides = [1, 1, 1]} : vector<4x8x16xf32> to vector<4x1x16xf32>
    %131 = vector.shape_cast %130 : vector<4x1x16xf32> to vector<4x16xf32>
    %132 = vector.extract_strided_slice %127 {offsets = [0, 2, 0], sizes = [4, 1, 16], strides = [1, 1, 1]} : vector<4x8x16xf32> to vector<4x1x16xf32>
    %133 = vector.shape_cast %132 : vector<4x1x16xf32> to vector<4x16xf32>
    %134 = vector.extract_strided_slice %127 {offsets = [0, 3, 0], sizes = [4, 1, 16], strides = [1, 1, 1]} : vector<4x8x16xf32> to vector<4x1x16xf32>
    %135 = vector.shape_cast %134 : vector<4x1x16xf32> to vector<4x16xf32>
    %136 = vector.extract_strided_slice %127 {offsets = [0, 4, 0], sizes = [4, 1, 16], strides = [1, 1, 1]} : vector<4x8x16xf32> to vector<4x1x16xf32>
    %137 = vector.shape_cast %136 : vector<4x1x16xf32> to vector<4x16xf32>
    %138 = vector.extract_strided_slice %127 {offsets = [0, 5, 0], sizes = [4, 1, 16], strides = [1, 1, 1]} : vector<4x8x16xf32> to vector<4x1x16xf32>
    %139 = vector.shape_cast %138 : vector<4x1x16xf32> to vector<4x16xf32>
    %140 = vector.extract_strided_slice %127 {offsets = [0, 6, 0], sizes = [4, 1, 16], strides = [1, 1, 1]} : vector<4x8x16xf32> to vector<4x1x16xf32>
    %141 = vector.shape_cast %140 : vector<4x1x16xf32> to vector<4x16xf32>
    %142 = vector.extract_strided_slice %127 {offsets = [0, 7, 0], sizes = [4, 1, 16], strides = [1, 1, 1]} : vector<4x8x16xf32> to vector<4x1x16xf32>
    %143 = vector.shape_cast %142 : vector<4x1x16xf32> to vector<4x16xf32>
    %144 = tpu.concatenate %129, %131, %133, %135, %137, %139, %141, %143 in 1 : vector<4x16xf32>, vector<4x16xf32>, vector<4x16xf32>, vector<4x16xf32>, vector<4x16xf32>, vector<4x16xf32>, vector<4x16xf32>, vector<4x16xf32> -> vector<4x128xf32>
    %c2_i32_17 = arith.constant 2 : i32
    %145 = arith.addi %4, %c2_i32_17 : i32
    %c0_18 = arith.constant 0 : index
    %146 = arith.index_cast %145 : i32 to index
    %c1_19 = arith.constant 1 : index
    %147 = vector.load %arg6[%c0_18, %146, %c1_19] : memref<4x18x18xf32, #tpu.memory_space<vmem>>, vector<4x8x16xf32>
    %148 = vector.extract_strided_slice %147 {offsets = [0, 0, 0], sizes = [4, 1, 16], strides = [1, 1, 1]} : vector<4x8x16xf32> to vector<4x1x16xf32>
    %149 = vector.shape_cast %148 : vector<4x1x16xf32> to vector<4x16xf32>
    %150 = vector.extract_strided_slice %147 {offsets = [0, 1, 0], sizes = [4, 1, 16], strides = [1, 1, 1]} : vector<4x8x16xf32> to vector<4x1x16xf32>
    %151 = vector.shape_cast %150 : vector<4x1x16xf32> to vector<4x16xf32>
    %152 = vector.extract_strided_slice %147 {offsets = [0, 2, 0], sizes = [4, 1, 16], strides = [1, 1, 1]} : vector<4x8x16xf32> to vector<4x1x16xf32>
    %153 = vector.shape_cast %152 : vector<4x1x16xf32> to vector<4x16xf32>
    %154 = vector.extract_strided_slice %147 {offsets = [0, 3, 0], sizes = [4, 1, 16], strides = [1, 1, 1]} : vector<4x8x16xf32> to vector<4x1x16xf32>
    %155 = vector.shape_cast %154 : vector<4x1x16xf32> to vector<4x16xf32>
    %156 = vector.extract_strided_slice %147 {offsets = [0, 4, 0], sizes = [4, 1, 16], strides = [1, 1, 1]} : vector<4x8x16xf32> to vector<4x1x16xf32>
    %157 = vector.shape_cast %156 : vector<4x1x16xf32> to vector<4x16xf32>
    %158 = vector.extract_strided_slice %147 {offsets = [0, 5, 0], sizes = [4, 1, 16], strides = [1, 1, 1]} : vector<4x8x16xf32> to vector<4x1x16xf32>
    %159 = vector.shape_cast %158 : vector<4x1x16xf32> to vector<4x16xf32>
    %160 = vector.extract_strided_slice %147 {offsets = [0, 6, 0], sizes = [4, 1, 16], strides = [1, 1, 1]} : vector<4x8x16xf32> to vector<4x1x16xf32>
    %161 = vector.shape_cast %160 : vector<4x1x16xf32> to vector<4x16xf32>
    %162 = vector.extract_strided_slice %147 {offsets = [0, 7, 0], sizes = [4, 1, 16], strides = [1, 1, 1]} : vector<4x8x16xf32> to vector<4x1x16xf32>
    %163 = vector.shape_cast %162 : vector<4x1x16xf32> to vector<4x16xf32>
    %164 = tpu.concatenate %149, %151, %153, %155, %157, %159, %161, %163 in 1 : vector<4x16xf32>, vector<4x16xf32>, vector<4x16xf32>, vector<4x16xf32>, vector<4x16xf32>, vector<4x16xf32>, vector<4x16xf32>, vector<4x16xf32> -> vector<4x128xf32>
    %c2_i32_20 = arith.constant 2 : i32
    %165 = arith.addi %4, %c2_i32_20 : i32
    %c0_21 = arith.constant 0 : index
    %166 = arith.index_cast %165 : i32 to index
    %c2_22 = arith.constant 2 : index
    %167 = vector.load %arg6[%c0_21, %166, %c2_22] : memref<4x18x18xf32, #tpu.memory_space<vmem>>, vector<4x8x16xf32>
    %168 = vector.extract_strided_slice %167 {offsets = [0, 0, 0], sizes = [4, 1, 16], strides = [1, 1, 1]} : vector<4x8x16xf32> to vector<4x1x16xf32>
    %169 = vector.shape_cast %168 : vector<4x1x16xf32> to vector<4x16xf32>
    %170 = vector.extract_strided_slice %167 {offsets = [0, 1, 0], sizes = [4, 1, 16], strides = [1, 1, 1]} : vector<4x8x16xf32> to vector<4x1x16xf32>
    %171 = vector.shape_cast %170 : vector<4x1x16xf32> to vector<4x16xf32>
    %172 = vector.extract_strided_slice %167 {offsets = [0, 2, 0], sizes = [4, 1, 16], strides = [1, 1, 1]} : vector<4x8x16xf32> to vector<4x1x16xf32>
    %173 = vector.shape_cast %172 : vector<4x1x16xf32> to vector<4x16xf32>
    %174 = vector.extract_strided_slice %167 {offsets = [0, 3, 0], sizes = [4, 1, 16], strides = [1, 1, 1]} : vector<4x8x16xf32> to vector<4x1x16xf32>
    %175 = vector.shape_cast %174 : vector<4x1x16xf32> to vector<4x16xf32>
    %176 = vector.extract_strided_slice %167 {offsets = [0, 4, 0], sizes = [4, 1, 16], strides = [1, 1, 1]} : vector<4x8x16xf32> to vector<4x1x16xf32>
    %177 = vector.shape_cast %176 : vector<4x1x16xf32> to vector<4x16xf32>
    %178 = vector.extract_strided_slice %167 {offsets = [0, 5, 0], sizes = [4, 1, 16], strides = [1, 1, 1]} : vector<4x8x16xf32> to vector<4x1x16xf32>
    %179 = vector.shape_cast %178 : vector<4x1x16xf32> to vector<4x16xf32>
    %180 = vector.extract_strided_slice %167 {offsets = [0, 6, 0], sizes = [4, 1, 16], strides = [1, 1, 1]} : vector<4x8x16xf32> to vector<4x1x16xf32>
    %181 = vector.shape_cast %180 : vector<4x1x16xf32> to vector<4x16xf32>
    %182 = vector.extract_strided_slice %167 {offsets = [0, 7, 0], sizes = [4, 1, 16], strides = [1, 1, 1]} : vector<4x8x16xf32> to vector<4x1x16xf32>
    %183 = vector.shape_cast %182 : vector<4x1x16xf32> to vector<4x16xf32>
    %184 = tpu.concatenate %169, %171, %173, %175, %177, %179, %181, %183 in 1 : vector<4x16xf32>, vector<4x16xf32>, vector<4x16xf32>, vector<4x16xf32>, vector<4x16xf32>, vector<4x16xf32>, vector<4x16xf32>, vector<4x16xf32> -> vector<4x128xf32>
    %185 = tpu.concatenate %24, %44, %64, %84, %104, %124, %144, %164, %184 in 0 : vector<4x128xf32>, vector<4x128xf32>, vector<4x128xf32>, vector<4x128xf32>, vector<4x128xf32>, vector<4x128xf32>, vector<4x128xf32>, vector<4x128xf32>, vector<4x128xf32> -> vector<36x128xf32>
    %c0_23 = arith.constant 0 : index
    %c0_24 = arith.constant 0 : index
    %186 = vector.load %arg3[%c0_23, %c0_24] : memref<8x36xf32, #tpu.memory_space<vmem>>, vector<8x36xf32>
    %cst = arith.constant dense<0.000000e+00> : vector<8x128xf32>
    %187 = tpu.matmul %186, %185, %cst {dimension_numbers = #tpu.dot_dimension_numbers<[1], [0], [0], [1], [0, 0, 1, 1], [], []>} : vector<8x36xf32>, vector<36x128xf32>, vector<8x128xf32> -> vector<8x128xf32>
    %c0_25 = arith.constant 0 : index
    %c0_26 = arith.constant 0 : index
    %188 = vector.load %arg4[%c0_25, %c0_26] : memref<8x1xf32, #tpu.memory_space<vmem>>, vector<8x1xf32>
    %189 = vector.broadcast %188 : vector<8x1xf32> to vector<8x128xf32>
    %190 = arith.addf %187, %189 : vector<8x128xf32>
    %c0_27 = arith.constant 0 : index
    %c0_28 = arith.constant 0 : index
    %c0_29 = arith.constant 0 : index
    %191 = vector.load %arg5[%c0_27, %c0_28, %c0_29] : memref<1x8x128xf32, #tpu.memory_space<vmem>>, vector<1x8x128xf32>
    %192 = vector.shape_cast %191 : vector<1x8x128xf32> to vector<8x128xf32>
    %193 = vector.shape_cast %190 : vector<8x128xf32> to vector<1x8x128xf32>
    tpu.vector_store %arg5[%c0_27, %c0_28, %c0_29], %193 {strides = array<i32>} : memref<1x8x128xf32, #tpu.memory_space<vmem>>, vector<1x8x128xf32>,
    return
  }
  func.func @transform_0(%arg0: i32, %arg1: i32) -> (i32, i32, i32, i32) {
    %c0_i32 = arith.constant 0 : i32
    %c0_i32_0 = arith.constant 0 : i32
    %c0_i32_1 = arith.constant 0 : i32
    %c0_i32_2 = arith.constant 0 : i32
    return %arg0, %c0_i32, %c0_i32_0, %c0_i32_1 : i32, i32, i32, i32
  }
  func.func @transform_1(%arg0: i32, %arg1: i32) -> (i32, i32) {
    %c0_i32 = arith.constant 0 : i32
    %c0_i32_0 = arith.constant 0 : i32
    %c0_i32_1 = arith.constant 0 : i32
    return %c0_i32, %c0_i32_0 : i32, i32
  }
  func.func @transform_2(%arg0: i32, %arg1: i32) -> (i32, i32) {
    %c0_i32 = arith.constant 0 : i32
    %c0_i32_0 = arith.constant 0 : i32
    %c0_i32_1 = arith.constant 0 : i32
    return %c0_i32, %c0_i32_0 : i32, i32
  }
  func.func @transform_3(%arg0: i32, %arg1: i32) -> (i32, i32, i32) {
    %c0_i32 = arith.constant 0 : i32
    %c0_i32_0 = arith.constant 0 : i32
    return %arg0, %c0_i32, %arg1 : i32, i32, i32
  }
}

</mosaic_0001>

<llo_original>
// kernel: tpu_custom_call.1
$region0: #{tpu_custom_call.1}
  #allocation0 [shape = 'u32[]', space=smem, size = 0x4, offset = 0x4, fixed_abs, tag = 'smem constant byte address 0x4 - core index']
  #allocation1 [shape = 'u32[72,128]{1,0:T(1,128)}', space=vmem, size = 0x9000, scoped, tag = 'internal scratch']
  #allocation2 [shape = 'f32[4,18,18]{2,1,0:T(8,128)}', space=vmem, size = 0xc000, scoped, tag = 'scratch operand']
  %s0 = inlined_call_operand.hbm [shape: f32[2,4,16,16], index: 0, kind: input, shape index: {}]
  %s1 = inlined_call_operand.vmem [shape: f32[8,36], index: 1, kind: input, shape index: {}]
  %s2 = inlined_call_operand.vmem [shape: f32[8,1], index: 2, kind: input, shape index: {}]
  %s3 = inlined_call_operand.hbm [shape: f32[2,8,256], index: 3, kind: output, shape index: {}]
  %s4 = sld [smem:[#allocation0]]
  $region53: #{tpu_custom_call.1} parent=0
    _
  %s6 = ssub.s32 1, %s4
  %s7 = scalar_select 0, %s6, %s4
  $region1: #{tpu_custom_call.1} parent=0
    #allocation3 [shape = 'u8[65536]{0}', space=vmem, size = 0x10000, scoped, tag = 'input window, operand 0']
    #allocation4 [shape = 's32[2]{0}', space=sflag, size = 0x8, scoped, tag = 'scoped memory for tpu_custom_call.1']
    #allocation5 [shape = 's32[2]{0}', space=sflag, size = 0x8, scoped, tag = 'scoped memory for tpu_custom_call.1']
    #allocation6 [shape = 'u8[8192]{0}', space=vmem, size = 0x2000, scoped, tag = 'output window, operand 0']
    %8 = vsyncpa [#allocation4], 0
    %s9 = scalar_lea.sflag [#allocation4], 1
    %10 = vsyncpa %s9, 0
    %11 = vsyncpa [#allocation5], 0
    %s12 = scalar_lea.sflag [#allocation5], 1
    %13 = vsyncpa %s12, 0
    loop: start=0, step=1, limit=6
    $region2: #{tpu_custom_call.1} parent=1 // loop_pre_header
      _
    $region3: #{tpu_custom_call.1} parent=1 // loop_header
      %s15 = sphi 0, %s19
      %p16 = scmp.ge.s32.totalorder %s15, 6
      %s22 = sphi 0, %s34
      %s23 = sphi 0, %s30
      %s24 = sphi 0, %s22
      %s25 = sphi 0, %s23
      %s26 = sphi 0, %s24
      %s27 = sphi 0, %s25
      %s37 = sphi 0, %s39
      %s40 = sphi 0, %s37
      %s41 = sphi 0, %s40
      %s57 = sphi 0, %s41
      %s61 = sphi 0, %s61
      %s63 = sphi 0, %s61
      %s64 = sphi 0, %s63
      %s78 = sphi 0, %s64
      %s82 = sphi 0, %s82
      %s84 = sphi 0, %s82
      %s85 = sphi 0, %s84
      %s99 = sphi 0, %s85
      %s107 = sphi 0, %s109
      %s110 = sphi 0, %s107
      %s111 = sphi 0, %s110
      %s127 = sphi 0, %s111
    $region4: #{tpu_custom_call.1} parent=1 // loop_header_branch
      %18 = sbr.rel (%p16) target = $region8
    $region5: #{tpu_custom_call.1} parent=1 // loop_body
      %s20 = ssub.s32 %s15, 1
      %s21 = ssub.s32 %s15, 2
      %s28 = sadd.s32 1, %s23
      %p29 = scmp.ge.s32.totalorder %s28, 2
      %s30 = scalar_select %p29, 0, %s28
      %s31 = sadd.s32 1, %s22
      %s32 = scalar_select %p29, %s31, %s22
      %p33 = scmp.ge.s32.totalorder %s32, 2
      %s34 = scalar_select %p33, 0, %s32
      %s35 = ssub.s32 %s22, %s34
      %p36 = scmp.eq.s32.totalorder %s35, 0
      %s38 = sadd.s32 %s37, 1
      %s39 = scalar_select %p36, %s37, %s38
      %p42 = pneg %p36
      %p43 = scmp.eq.s32.totalorder %s15, 3
      %p44 = por %p42, %p43
      %p45 = scmp.ne.s32.totalorder %s37, %s40
      %p46 = scmp.eq.s32.totalorder %s15, 0
      %p47 = por %p45, %p46
      %p48 = scmp.ne.s32.totalorder %s37, %s40
      %p49 = scmp.eq.s32.totalorder %s20, 3
      %p50 = por %p48, %p49
      %p51 = scmp.ne.s32.totalorder %s40, %s41
      %p52 = scmp.eq.s32.totalorder %s20, 0
      %p53 = por %p51, %p52
      %p54 = scmp.ne.s32.totalorder %s40, %s41
      %p55 = scmp.eq.s32.totalorder %s21, 3
      %p56 = por %p54, %p55
      %p58 = scmp.ne.s32.totalorder %s41, %s57
      %p59 = scmp.eq.s32.totalorder %s21, 0
      %p60 = por %p58, %p59
      %s62 = sadd.s32 %s61, 1
      %p65 = scmp.eq.s32.totalorder %s15, 3
      %p66 = scmp.ne.s32.totalorder %s61, %s63
      %p67 = scmp.eq.s32.totalorder %s15, 0
      %p68 = por %p66, %p67
      %p69 = scmp.ne.s32.totalorder %s61, %s63
      %p70 = scmp.eq.s32.totalorder %s20, 3
      %p71 = por %p69, %p70
      %p72 = scmp.ne.s32.totalorder %s63, %s64
      %p73 = scmp.eq.s32.totalorder %s20, 0
      %p74 = por %p72, %p73
      %p75 = scmp.ne.s32.totalorder %s63, %s64
      %p76 = scmp.eq.s32.totalorder %s21, 3
      %p77 = por %p75, %p76
      %p79 = scmp.ne.s32.totalorder %s64, %s78
      %p80 = scmp.eq.s32.totalorder %s21, 0
      %p81 = por %p79, %p80
      %s83 = sadd.s32 %s82, 1
      %p86 = scmp.eq.s32.totalorder %s15, 3
      %p87 = scmp.ne.s32.totalorder %s82, %s84
      %p88 = scmp.eq.s32.totalorder %s15, 0
      %p89 = por %p87, %p88
      %p90 = scmp.ne.s32.totalorder %s82, %s84
      %p91 = scmp.eq.s32.totalorder %s20, 3
      %p92 = por %p90, %p91
      %p93 = scmp.ne.s32.totalorder %s84, %s85
      %p94 = scmp.eq.s32.totalorder %s20, 0
      %p95 = por %p93, %p94
      %p96 = scmp.ne.s32.totalorder %s84, %s85
      %p97 = scmp.eq.s32.totalorder %s21, 3
      %p98 = por %p96, %p97
      %p100 = scmp.ne.s32.totalorder %s85, %s99
      %p101 = scmp.eq.s32.totalorder %s21, 0
      %p102 = por %p100, %p101
      %s103 = ssub.s32 %s22, %s34
      %s104 = ssub.s32 %s23, %s30
      %s105 = sor.u32 %s103, %s104
      %p106 = scmp.eq.s32.totalorder %s105, 0
      %s108 = sadd.s32 %s107, 1
      %s109 = scalar_select %p106, %s107, %s108
      %p112 = pneg %p106
      %p113 = scmp.eq.s32.totalorder %s15, 3
      %p114 = por %p112, %p113
      %p115 = scmp.ne.s32.totalorder %s107, %s110
      %p116 = scmp.eq.s32.totalorder %s15, 0
      %p117 = por %p115, %p116
      %p118 = scmp.ne.s32.totalorder %s107, %s110
      %p119 = scmp.eq.s32.totalorder %s20, 3
      %p120 = por %p118, %p119
      %p121 = scmp.ne.s32.totalorder %s110, %s111
      %p122 = scmp.eq.s32.totalorder %s20, 0
      %p123 = por %p121, %p122
      %p124 = scmp.ne.s32.totalorder %s110, %s111
      %p125 = scmp.eq.s32.totalorder %s21, 3
      %p126 = por %p124, %p125
      %p128 = scmp.ne.s32.totalorder %s111, %s127
      %p129 = scmp.eq.s32.totalorder %s21, 0
      %p130 = por %p128, %p129
      %p131 = scmp.le.s32.totalorder 1, %s15
      %p132 = scmp.lt.s32.totalorder %s15, 5
      %p133 = pnand %p131, %p132
      %p134 = pneg %p133
      // Predicated region
      $region9: #{tpu_custom_call.1} parent=5 // pred_check
        _
      $region10: #{tpu_custom_call.1} parent=5 // pred_check_branch
        %136 = sbr.rel (%p133) target = $region12
      $region11: #{tpu_custom_call.1} parent=5 // pred_region
        %s137 = ssub.s32 %s15, 1
        // Predicated region
        $region13: #{tpu_custom_call.1} parent=11 // pred_check
          %p138 = pneg %p74
        $region14: #{tpu_custom_call.1} parent=11 // pred_check_branch
          %140 = sbr.rel (%p138) target = $region16
        $region15: #{tpu_custom_call.1} parent=11 // pred_region
          _
        $region16: #{tpu_custom_call.1} parent=11 // pred_fallthru
          _
        // Predicated region
        $region17: #{tpu_custom_call.1} parent=11 // pred_check
          %p141 = pneg %p95
        $region18: #{tpu_custom_call.1} parent=11 // pred_check_branch
          %143 = sbr.rel (%p141) target = $region20
        $region19: #{tpu_custom_call.1} parent=11 // pred_region
          _
        $region20: #{tpu_custom_call.1} parent=11 // pred_fallthru
          _
      $region12: #{tpu_custom_call.1} parent=5 // pred_fallthru
        _
      %p144 = scmp.lt.s32.totalorder %s15, 4
      // Predicated region
      $region21: #{tpu_custom_call.1} parent=5 // pred_check
        %p145 = pneg %p144
      $region22: #{tpu_custom_call.1} parent=5 // pred_check_branch
        %147 = sbr.rel (%p145) target = $region24
      $region23: #{tpu_custom_call.1} parent=5 // pred_region
        // Predicated region
        $region25: #{tpu_custom_call.1} parent=23 // pred_check
          %p148 = pneg %p47
        $region26: #{tpu_custom_call.1} parent=23 // pred_check_branch
          %150 = sbr.rel (%p148) target = $region28
        $region27: #{tpu_custom_call.1} parent=23 // pred_region
          %s151 = sand.u32 %s37, 1
          %s152 = scalar_lea.sflag [#allocation4], %s151
          %s153 = sand.u32 %s37, 1
          %s154 = smul.addr %s153, 64
          %s155 = scalar_lea.vmem [#allocation3], %s154
          %157 = vsyncadd %s152, 0
          %s158 = smul.addr %s22, 8
          %s159 = smul.addr %s158, 8
          %s160 = scalar_lea.hbm %s0, %s159
          %s161 = sshll.u32 %s160, 4
          %s162 = int_to_ptr.hbm [resolvable:$true] %s161
          %s163 = sshll.u32 %s155, 4
          %s164 = int_to_ptr.vmem [resolvable:$true] %s163
          %169 = dma.hbm_to_vmem [thread:$0]  %s162, 1024, %s164, %s152, 128, 128, 8
        $region28: #{tpu_custom_call.1} parent=23 // pred_fallthru
          _
      $region24: #{tpu_custom_call.1} parent=5 // pred_fallthru
        _
      %p170 = scmp.le.s32.totalorder 1, %s15
      %p171 = scmp.lt.s32.totalorder %s15, 5
      %p172 = pnand %p170, %p171
      %p173 = pneg %p172
      // Predicated region
      $region29: #{tpu_custom_call.1} parent=5 // pred_check
        _
      $region30: #{tpu_custom_call.1} parent=5 // pred_check_branch
        %175 = sbr.rel (%p172) target = $region32
      $region31: #{tpu_custom_call.1} parent=5 // pred_region
        %s176 = ssub.s32 %s15, 1
        %s177 = sand.u32 %s40, 1
        %s178 = scalar_lea.sflag [#allocation4], %s177
        %s179 = sand.u32 %s40, 1
        %s180 = smul.addr %s179, 64
        %s181 = scalar_lea.vmem [#allocation3], %s180
        // Predicated region
        $region33: #{tpu_custom_call.1} parent=31 // pred_check
          %p182 = pneg %p53
        $region34: #{tpu_custom_call.1} parent=31 // pred_check_branch
          %184 = sbr.rel (%p182) target = $region36
        $region35: #{tpu_custom_call.1} parent=31 // pred_region
          %186 = dma.done %s178, 1024
        $region36: #{tpu_custom_call.1} parent=31 // pred_fallthru
          _
        %s187 = sand.u32 %s40, 1
        %s188 = scalar_lea.sflag [#allocation4], %s187
        %s189 = sand.u32 %s40, 1
        %s190 = smul.addr %s189, 64
        %s191 = scalar_lea.vmem [#allocation3], %s190
        %p192 = pneg %p53
        %p193 = pneg %p50
        %p194 = pneg %p74
        %p195 = pneg %p71
        %p196 = pneg %p95
        %p197 = pneg %p92
        %p198 = pneg %p123
        %p199 = pneg %p120
        %s200 = sand.u32 %s110, 1
        %s201 = scalar_lea.sflag [#allocation5], %s200
        %s202 = sand.u32 %s110, 1
        %s203 = smul.addr %s202, 8
        %s204 = scalar_lea.vmem [#allocation6], %s203
        %p205 = scmp.eq.s32.totalorder %s25, 0
        // Predicated region
        $region37: #{tpu_custom_call.1} parent=31 // pred_check
          %p206 = pneg %p205
        $region38: #{tpu_custom_call.1} parent=31 // pred_check_branch
          %208 = sbr.rel (%p206) target = $region40
        $region39: #{tpu_custom_call.1} parent=31 // pred_region
          %vm209 = vcmask 146432
          %210 = vst.msk [vmem:[#allocation2] sm:$0xff] %vm209, 0.0
          %211 = vst.msk [vmem:[#allocation2 + $0x8] sm:$0xff] %vm209, 0.0
          %vm212 = vcmask 140288
          %213 = vst.msk [vmem:[#allocation2 + $0x10] sm:$0x3] %vm212, 0.0
          %214 = vst.msk [vmem:[#allocation2 + $0x18] sm:$0xff] %vm209, 0.0
          %215 = vst.msk [vmem:[#allocation2 + $0x20] sm:$0xff] %vm209, 0.0
          %216 = vst.msk [vmem:[#allocation2 + $0x28] sm:$0x3] %vm212, 0.0
          %217 = vst.msk [vmem:[#allocation2 + $0x30] sm:$0xff] %vm209, 0.0
          %218 = vst.msk [vmem:[#allocation2 + $0x38] sm:$0xff] %vm209, 0.0
          %219 = vst.msk [vmem:[#allocation2 + $0x40] sm:$0x3] %vm212, 0.0
          %220 = vst.msk [vmem:[#allocation2 + $0x48] sm:$0xff] %vm209, 0.0
          %221 = vst.msk [vmem:[#allocation2 + $0x50] sm:$0xff] %vm209, 0.0
          %222 = vst.msk [vmem:[#allocation2 + $0x58] sm:$0x3] %vm212, 0.0
          %v223 = vld [vmem:[%s181] sm:$0xff]
          %v224 = vld [vmem:[%s181 + $0x8] sm:$0xff]
          %v225 = vld [vmem:[%s181 + $0x10] sm:$0xff]
          %v226 = vld [vmem:[%s181 + $0x18] sm:$0xff]
          %v227 = vld [vmem:[%s181 + $0x20] sm:$0xff]
          %v228 = vld [vmem:[%s181 + $0x28] sm:$0xff]
          %v229 = vld [vmem:[%s181 + $0x30] sm:$0xff]
          %v230 = vld [vmem:[%s181 + $0x38] sm:$0xff]
          %239 = vrot.lane.b32.xlu0 %v223, 1
          %v240 = vpop.permute.xlu0 %239
          %241 = vrot.lane.b32.xlu0 %v224, 1
          %v242 = vpop.permute.xlu0 %241
          %243 = vrot.lane.b32.xlu0 %v225, 1
          %v244 = vpop.permute.xlu0 %243
          %245 = vrot.lane.b32.xlu0 %v226, 1
          %v246 = vpop.permute.xlu0 %245
          %247 = vrot.lane.b32.xlu0 %v227, 1
          %v248 = vpop.permute.xlu0 %247
          %249 = vrot.lane.b32.xlu0 %v228, 1
          %v250 = vpop.permute.xlu0 %249
          %251 = vrot.lane.b32.xlu0 %v229, 1
          %v252 = vpop.permute.xlu0 %251
          %253 = vrot.lane.b32.xlu0 %v230, 1
          %v254 = vpop.permute.xlu0 %253
          %vm263 = vcmask 138248
          %264 = vst.msk [vmem:[#allocation2 + $0x1] sm:$0xff] %vm263, %v240
          %265 = vst.msk [vmem:[#allocation2 + $0x9] sm:$0xff] %vm263, %v242
          %266 = vst.msk [vmem:[#allocation2 + $0x19] sm:$0xff] %vm263, %v244
          %267 = vst.msk [vmem:[#allocation2 + $0x21] sm:$0xff] %vm263, %v246
          %268 = vst.msk [vmem:[#allocation2 + $0x31] sm:$0xff] %vm263, %v248
          %269 = vst.msk [vmem:[#allocation2 + $0x39] sm:$0xff] %vm263, %v250
          %270 = vst.msk [vmem:[#allocation2 + $0x49] sm:$0xff] %vm263, %v252
          %271 = vst.msk [vmem:[#allocation2 + $0x51] sm:$0xff] %vm263, %v254
        $region40: #{tpu_custom_call.1} parent=31 // pred_fallthru
          _
        %s272 = smul.u32 %s25, 8
        %s273 = scalar_lea.vmem [#allocation2], %s272
        %v274 = vld [vmem:[%s273] sm:$0xff]
        %v275 = vld [vmem:[%s273 + $0x18] sm:$0xff]
        %v276 = vld [vmem:[%s273 + $0x30] sm:$0xff]
        %v277 = vld [vmem:[%s273 + $0x48] sm:$0xff]
        %v282 = vrot.slane %v275, 7
        %vm283 = vcmask 1041409
        %v284 = vsel %vm283, %v282, %v274
        %v285 = vrot.slane %v276, 6
        %vm286 = vcmask 1042434
        %v287 = vsel %vm286, %v285, %v284
        %v288 = vrot.slane %v277, 5
        %vm289 = vcmask 1043459
        %v290 = vsel %vm289, %v288, %v287
        %v292 = vrot.slane %v274, 1
        %v293 = vsel %vm283, %v275, %v292
        %v294 = vrot.slane %v276, 7
        %v295 = vsel %vm286, %v294, %v293
        %v296 = vrot.slane %v277, 6
        %v297 = vsel %vm289, %v296, %v295
        %298 = vrot.lane.b32.xlu0 %v297, 16
        %v299 = vpop.permute.xlu0 %298
        %v301 = vrot.slane %v274, 2
        %v302 = vrot.slane %v275, 1
        %v303 = vsel %vm283, %v302, %v301
        %v304 = vsel %vm286, %v276, %v303
        %v305 = vrot.slane %v277, 7
        %v306 = vsel %vm289, %v305, %v304
        %307 = vrot.lane.b32.xlu0 %v306, 32
        %v308 = vpop.permute.xlu0 %307
        %v310 = vrot.slane %v274, 3
        %v311 = vrot.slane %v275, 2
        %v312 = vsel %vm283, %v311, %v310
        %v313 = vrot.slane %v276, 1
        %v314 = vsel %vm286, %v313, %v312
        %v315 = vsel %vm289, %v277, %v314
        %316 = vrot.lane.b32.xlu0 %v315, 48
        %v317 = vpop.permute.xlu0 %316
        %v319 = vrot.slane %v274, 4
        %v320 = vrot.slane %v275, 3
        %v321 = vsel %vm283, %v320, %v319
        %v322 = vrot.slane %v276, 2
        %v323 = vsel %vm286, %v322, %v321
        %v324 = vrot.slane %v277, 1
        %v325 = vsel %vm289, %v324, %v323
        %326 = vrot.lane.b32.xlu0 %v325, 64
        %v327 = vpop.permute.xlu0 %326
        %v329 = vrot.slane %v274, 5
        %v330 = vrot.slane %v275, 4
        %v331 = vsel %vm283, %v330, %v329
        %v332 = vrot.slane %v276, 3
        %v333 = vsel %vm286, %v332, %v331
        %v334 = vrot.slane %v277, 2
        %v335 = vsel %vm289, %v334, %v333
        %336 = vrot.lane.b32.xlu0 %v335, 80
        %v337 = vpop.permute.xlu0 %336
        %v339 = vrot.slane %v274, 6
        %v340 = vrot.slane %v275, 5
        %v341 = vsel %vm283, %v340, %v339
        %v342 = vrot.slane %v276, 4
        %v343 = vsel %vm286, %v342, %v341
        %v344 = vrot.slane %v277, 3
        %v345 = vsel %vm289, %v344, %v343
        %346 = vrot.lane.b32.xlu0 %v345, 96
        %v347 = vpop.permute.xlu0 %346
        %v349 = vrot.slane %v274, 7
        %v350 = vrot.slane %v275, 6
        %v351 = vsel %vm283, %v350, %v349
        %v352 = vrot.slane %v276, 5
        %v353 = vsel %vm286, %v352, %v351
        %v354 = vrot.slane %v277, 4
        %v355 = vsel %vm289, %v354, %v353
        %356 = vrot.lane.b32.xlu0 %v355, 112
        %v357 = vpop.permute.xlu0 %356
        %vm359 = vcmask 130048
        %v360 = vsel %vm359, %v290, %v299
        %vm361 = vcmask 261120
        %v362 = vsel %vm361, %v360, %v308
        %vm363 = vcmask 392192
        %v364 = vsel %vm363, %v362, %v317
        %vm365 = vcmask 523264
        %v366 = vsel %vm365, %v364, %v327
        %vm367 = vcmask 654336
        %v368 = vsel %vm367, %v366, %v337
        %vm369 = vcmask 785408
        %v370 = vsel %vm369, %v368, %v347
        %vm371 = vcmask 916480
        %v372 = vsel %vm371, %v370, %v357
        %373 = vrot.lane.b32.xlu0 %v290, 127
        %v374 = vpop.permute.xlu0 %373
        %376 = vrot.lane.b32.xlu0 %v297, 15
        %v377 = vpop.permute.xlu0 %376
        %379 = vrot.lane.b32.xlu0 %v306, 31
        %v380 = vpop.permute.xlu0 %379
        %382 = vrot.lane.b32.xlu0 %v315, 47
        %v383 = vpop.permute.xlu0 %382
        %385 = vrot.lane.b32.xlu0 %v325, 63
        %v386 = vpop.permute.xlu0 %385
        %388 = vrot.lane.b32.xlu0 %v335, 79
        %v389 = vpop.permute.xlu0 %388
        %391 = vrot.lane.b32.xlu0 %v345, 95
        %v392 = vpop.permute.xlu0 %391
        %394 = vrot.lane.b32.xlu0 %v355, 111
        %v395 = vpop.permute.xlu0 %394
        %v397 = vsel %vm359, %v374, %v377
        %v398 = vsel %vm361, %v397, %v380
        %v399 = vsel %vm363, %v398, %v383
        %v400 = vsel %vm365, %v399, %v386
        %v401 = vsel %vm367, %v400, %v389
        %v402 = vsel %vm369, %v401, %v392
        %v403 = vsel %vm371, %v402, %v395
        %404 = vrot.lane.b32.xlu0 %v290, 126
        %v405 = vpop.permute.xlu0 %404
        %407 = vrot.lane.b32.xlu0 %v297, 14
        %v408 = vpop.permute.xlu0 %407
        %410 = vrot.lane.b32.xlu0 %v306, 30
        %v411 = vpop.permute.xlu0 %410
        %413 = vrot.lane.b32.xlu0 %v315, 46
        %v414 = vpop.permute.xlu0 %413
        %416 = vrot.lane.b32.xlu0 %v325, 62
        %v417 = vpop.permute.xlu0 %416
        %419 = vrot.lane.b32.xlu0 %v335, 78
        %v420 = vpop.permute.xlu0 %419
        %422 = vrot.lane.b32.xlu0 %v345, 94
        %v423 = vpop.permute.xlu0 %422
        %425 = vrot.lane.b32.xlu0 %v355, 110
        %v426 = vpop.permute.xlu0 %425
        %v428 = vsel %vm359, %v405, %v408
        %v429 = vsel %vm361, %v428, %v411
        %v430 = vsel %vm363, %v429, %v414
        %v431 = vsel %vm365, %v430, %v417
        %v432 = vsel %vm367, %v431, %v420
        %v433 = vsel %vm369, %v432, %v423
        %v434 = vsel %vm371, %v433, %v426
        %s435 = sadd.s32 %s272, 1
        %s436 = scalar_lea.vmem [#allocation2], %s435
        %v437 = vld [vmem:[%s436] sm:$0xff]
        %v438 = vld [vmem:[%s436 + $0x18] sm:$0xff]
        %v439 = vld [vmem:[%s436 + $0x30] sm:$0xff]
        %v440 = vld [vmem:[%s436 + $0x48] sm:$0xff]
        %v445 = vrot.slane %v438, 7
        %v446 = vsel %vm283, %v445, %v437
        %v447 = vrot.slane %v439, 6
        %v448 = vsel %vm286, %v447, %v446
        %v449 = vrot.slane %v440, 5
        %v450 = vsel %vm289, %v449, %v448
        %v452 = vrot.slane %v437, 1
        %v453 = vsel %vm283, %v438, %v452
        %v454 = vrot.slane %v439, 7
        %v455 = vsel %vm286, %v454, %v453
        %v456 = vrot.slane %v440, 6
        %v457 = vsel %vm289, %v456, %v455
        %458 = vrot.lane.b32.xlu0 %v457, 16
        %v459 = vpop.permute.xlu0 %458
        %v461 = vrot.slane %v437, 2
        %v462 = vrot.slane %v438, 1
        %v463 = vsel %vm283, %v462, %v461
        %v464 = vsel %vm286, %v439, %v463
        %v465 = vrot.slane %v440, 7
        %v466 = vsel %vm289, %v465, %v464
        %467 = vrot.lane.b32.xlu0 %v466, 32
        %v468 = vpop.permute.xlu0 %467
        %v470 = vrot.slane %v437, 3
        %v471 = vrot.slane %v438, 2
        %v472 = vsel %vm283, %v471, %v470
        %v473 = vrot.slane %v439, 1
        %v474 = vsel %vm286, %v473, %v472
        %v475 = vsel %vm289, %v440, %v474
        %476 = vrot.lane.b32.xlu0 %v475, 48
        %v477 = vpop.permute.xlu0 %476
        %v479 = vrot.slane %v437, 4
        %v480 = vrot.slane %v438, 3
        %v481 = vsel %vm283, %v480, %v479
        %v482 = vrot.slane %v439, 2
        %v483 = vsel %vm286, %v482, %v481
        %v484 = vrot.slane %v440, 1
        %v485 = vsel %vm289, %v484, %v483
        %486 = vrot.lane.b32.xlu0 %v485, 64
        %v487 = vpop.permute.xlu0 %486
        %v489 = vrot.slane %v437, 5
        %v490 = vrot.slane %v438, 4
        %v491 = vsel %vm283, %v490, %v489
        %v492 = vrot.slane %v439, 3
        %v493 = vsel %vm286, %v492, %v491
        %v494 = vrot.slane %v440, 2
        %v495 = vsel %vm289, %v494, %v493
        %496 = vrot.lane.b32.xlu0 %v495, 80
        %v497 = vpop.permute.xlu0 %496
        %v499 = vrot.slane %v437, 6
        %v500 = vrot.slane %v438, 5
        %v501 = vsel %vm283, %v500, %v499
        %v502 = vrot.slane %v439, 4
        %v503 = vsel %vm286, %v502, %v501
        %v504 = vrot.slane %v440, 3
        %v505 = vsel %vm289, %v504, %v503
        %506 = vrot.lane.b32.xlu0 %v505, 96
        %v507 = vpop.permute.xlu0 %506
        %v509 = vrot.slane %v437, 7
        %v510 = vrot.slane %v438, 6
        %v511 = vsel %vm283, %v510, %v509
        %v512 = vrot.slane %v439, 5
        %v513 = vsel %vm286, %v512, %v511
        %v514 = vrot.slane %v440, 4
        %v515 = vsel %vm289, %v514, %v513
        %516 = vrot.lane.b32.xlu0 %v515, 112
        %v517 = vpop.permute.xlu0 %516
        %v519 = vsel %vm359, %v450, %v459
        %v520 = vsel %vm361, %v519, %v468
        %v521 = vsel %vm363, %v520, %v477
        %v522 = vsel %vm365, %v521, %v487
        %v523 = vsel %vm367, %v522, %v497
        %v524 = vsel %vm369, %v523, %v507
        %v525 = vsel %vm371, %v524, %v517
        %526 = vrot.lane.b32.xlu0 %v450, 127
        %v527 = vpop.permute.xlu0 %526
        %529 = vrot.lane.b32.xlu0 %v457, 15
        %v530 = vpop.permute.xlu0 %529
        %532 = vrot.lane.b32.xlu0 %v466, 31
        %v533 = vpop.permute.xlu0 %532
        %535 = vrot.lane.b32.xlu0 %v475, 47
        %v536 = vpop.permute.xlu0 %535
        %538 = vrot.lane.b32.xlu0 %v485, 63
        %v539 = vpop.permute.xlu0 %538
        %541 = vrot.lane.b32.xlu0 %v495, 79
        %v542 = vpop.permute.xlu0 %541
        %544 = vrot.lane.b32.xlu0 %v505, 95
        %v545 = vpop.permute.xlu0 %544
        %547 = vrot.lane.b32.xlu0 %v515, 111
        %v548 = vpop.permute.xlu0 %547
        %v550 = vsel %vm359, %v527, %v530
        %v551 = vsel %vm361, %v550, %v533
        %v552 = vsel %vm363, %v551, %v536
        %v553 = vsel %vm365, %v552, %v539
        %v554 = vsel %vm367, %v553, %v542
        %v555 = vsel %vm369, %v554, %v545
        %v556 = vsel %vm371, %v555, %v548
        %557 = vrot.lane.b32.xlu0 %v450, 126
        %v558 = vpop.permute.xlu0 %557
        %560 = vrot.lane.b32.xlu0 %v457, 14
        %v561 = vpop.permute.xlu0 %560
        %563 = vrot.lane.b32.xlu0 %v466, 30
        %v564 = vpop.permute.xlu0 %563
        %566 = vrot.lane.b32.xlu0 %v475, 46
        %v567 = vpop.permute.xlu0 %566
        %569 = vrot.lane.b32.xlu0 %v485, 62
        %v570 = vpop.permute.xlu0 %569
        %572 = vrot.lane.b32.xlu0 %v495, 78
        %v573 = vpop.permute.xlu0 %572
        %575 = vrot.lane.b32.xlu0 %v505, 94
        %v576 = vpop.permute.xlu0 %575
        %578 = vrot.lane.b32.xlu0 %v515, 110
        %v579 = vpop.permute.xlu0 %578
        %v581 = vsel %vm359, %v558, %v561
        %v582 = vsel %vm361, %v581, %v564
        %v583 = vsel %vm363, %v582, %v567
        %v584 = vsel %vm365, %v583, %v570
        %v585 = vsel %vm367, %v584, %v573
        %v586 = vsel %vm369, %v585, %v576
        %v587 = vsel %vm371, %v586, %v579
        %s588 = sadd.s32 %s272, 2
        %s589 = scalar_lea.vmem [#allocation2], %s588
        %v590 = vld [vmem:[%s589] sm:$0xff]
        %v591 = vld [vmem:[%s589 + $0x18] sm:$0xff]
        %v592 = vld [vmem:[%s589 + $0x30] sm:$0xff]
        %v593 = vld [vmem:[%s589 + $0x48] sm:$0xff]
        %v598 = vrot.slane %v591, 7
        %v599 = vsel %vm283, %v598, %v590
        %v600 = vrot.slane %v592, 6
        %v601 = vsel %vm286, %v600, %v599
        %v602 = vrot.slane %v593, 5
        %v603 = vsel %vm289, %v602, %v601
        %v605 = vrot.slane %v590, 1
        %v606 = vsel %vm283, %v591, %v605
        %v607 = vrot.slane %v592, 7
        %v608 = vsel %vm286, %v607, %v606
        %v609 = vrot.slane %v593, 6
        %v610 = vsel %vm289, %v609, %v608
        %611 = vrot.lane.b32.xlu0 %v610, 16
        %v612 = vpop.permute.xlu0 %611
        %v614 = vrot.slane %v590, 2
        %v615 = vrot.slane %v591, 1
        %v616 = vsel %vm283, %v615, %v614
        %v617 = vsel %vm286, %v592, %v616
        %v618 = vrot.slane %v593, 7
        %v619 = vsel %vm289, %v618, %v617
        %620 = vrot.lane.b32.xlu0 %v619, 32
        %v621 = vpop.permute.xlu0 %620
        %v623 = vrot.slane %v590, 3
        %v624 = vrot.slane %v591, 2
        %v625 = vsel %vm283, %v624, %v623
        %v626 = vrot.slane %v592, 1
        %v627 = vsel %vm286, %v626, %v625
        %v628 = vsel %vm289, %v593, %v627
        %629 = vrot.lane.b32.xlu0 %v628, 48
        %v630 = vpop.permute.xlu0 %629
        %v632 = vrot.slane %v590, 4
        %v633 = vrot.slane %v591, 3
        %v634 = vsel %vm283, %v633, %v632
        %v635 = vrot.slane %v592, 2
        %v636 = vsel %vm286, %v635, %v634
        %v637 = vrot.slane %v593, 1
        %v638 = vsel %vm289, %v637, %v636
        %639 = vrot.lane.b32.xlu0 %v638, 64
        %v640 = vpop.permute.xlu0 %639
        %v642 = vrot.slane %v590, 5
        %v643 = vrot.slane %v591, 4
        %v644 = vsel %vm283, %v643, %v642
        %v645 = vrot.slane %v592, 3
        %v646 = vsel %vm286, %v645, %v644
        %v647 = vrot.slane %v593, 2
        %v648 = vsel %vm289, %v647, %v646
        %649 = vrot.lane.b32.xlu0 %v648, 80
        %v650 = vpop.permute.xlu0 %649
        %v652 = vrot.slane %v590, 6
        %v653 = vrot.slane %v591, 5
        %v654 = vsel %vm283, %v653, %v652
        %v655 = vrot.slane %v592, 4
        %v656 = vsel %vm286, %v655, %v654
        %v657 = vrot.slane %v593, 3
        %v658 = vsel %vm289, %v657, %v656
        %659 = vrot.lane.b32.xlu0 %v658, 96
        %v660 = vpop.permute.xlu0 %659
        %v662 = vrot.slane %v590, 7
        %v663 = vrot.slane %v591, 6
        %v664 = vsel %vm283, %v663, %v662
        %v665 = vrot.slane %v592, 5
        %v666 = vsel %vm286, %v665, %v664
        %v667 = vrot.slane %v593, 4
        %v668 = vsel %vm289, %v667, %v666
        %669 = vrot.lane.b32.xlu0 %v668, 112
        %v670 = vpop.permute.xlu0 %669
        %v672 = vsel %vm359, %v603, %v612
        %v673 = vsel %vm361, %v672, %v621
        %v674 = vsel %vm363, %v673, %v630
        %v675 = vsel %vm365, %v674, %v640
        %v676 = vsel %vm367, %v675, %v650
        %v677 = vsel %vm369, %v676, %v660
        %v678 = vsel %vm371, %v677, %v670
        %679 = vrot.lane.b32.xlu0 %v603, 127
        %v680 = vpop.permute.xlu0 %679
        %682 = vrot.lane.b32.xlu0 %v610, 15
        %v683 = vpop.permute.xlu0 %682
        %685 = vrot.lane.b32.xlu0 %v619, 31
        %v686 = vpop.permute.xlu0 %685
        %688 = vrot.lane.b32.xlu0 %v628, 47
        %v689 = vpop.permute.xlu0 %688
        %691 = vrot.lane.b32.xlu0 %v638, 63
        %v692 = vpop.permute.xlu0 %691
        %694 = vrot.lane.b32.xlu0 %v648, 79
        %v695 = vpop.permute.xlu0 %694
        %697 = vrot.lane.b32.xlu0 %v658, 95
        %v698 = vpop.permute.xlu0 %697
        %700 = vrot.lane.b32.xlu0 %v668, 111
        %v701 = vpop.permute.xlu0 %700
        %v703 = vsel %vm359, %v680, %v683
        %v704 = vsel %vm361, %v703, %v686
        %v705 = vsel %vm363, %v704, %v689
        %v706 = vsel %vm365, %v705, %v692
        %v707 = vsel %vm367, %v706, %v695
        %v708 = vsel %vm369, %v707, %v698
        %v709 = vsel %vm371, %v708, %v701
        %710 = vrot.lane.b32.xlu0 %v603, 126
        %v711 = vpop.permute.xlu0 %710
        %713 = vrot.lane.b32.xlu0 %v610, 14
        %v714 = vpop.permute.xlu0 %713
        %716 = vrot.lane.b32.xlu0 %v619, 30
        %v717 = vpop.permute.xlu0 %716
        %719 = vrot.lane.b32.xlu0 %v628, 46
        %v720 = vpop.permute.xlu0 %719
        %722 = vrot.lane.b32.xlu0 %v638, 62
        %v723 = vpop.permute.xlu0 %722
        %725 = vrot.lane.b32.xlu0 %v648, 78
        %v726 = vpop.permute.xlu0 %725
        %728 = vrot.lane.b32.xlu0 %v658, 94
        %v729 = vpop.permute.xlu0 %728
        %731 = vrot.lane.b32.xlu0 %v668, 110
        %v732 = vpop.permute.xlu0 %731
        %v734 = vsel %vm359, %v711, %v714
        %v735 = vsel %vm361, %v734, %v717
        %v736 = vsel %vm363, %v735, %v720
        %v737 = vsel %vm365, %v736, %v723
        %v738 = vsel %vm367, %v737, %v726
        %v739 = vsel %vm369, %v738, %v729
        %v740 = vsel %vm371, %v739, %v732
        %v742 = vrot.slane %v403, 4
        %v745 = vrot.slane %v525, 4
        %v748 = vrot.slane %v587, 4
        %v751 = vrot.slane %v709, 4
        %vm753 = vcmask 1043456
        %v754 = vsel %vm753, %v372, %v742
        %v755 = vsel %vm753, %v434, %v745
        %v756 = vsel %vm753, %v556, %v748
        %v757 = vsel %vm753, %v678, %v751
        %v758 = vld [vmem:[%s1] sm:$0xff]
        %v759 = vld [vmem:[%s2] sm:$0xff]
        %761 = vset.pattern.permute.xlu0 0
        %762 = vperm.xlu0 %761, %v759
        %v763 = vpop.permute.xlu0 %762
        %vm765 = vcmask 293888
        %v767 = vsel %vm765, %v758, 0
        %v770 = vsel %vm753, %v740, 0
        %772 = vmatpush.msra.mxu0 0.0
        %773 = vmatpush.msra.mxu0 0.0
        %774 = vmatpush.msra.mxu0 0.0
        %775 = vmatpush.msra.mxu0 0.0
        %776 = vmatpush.msra.mxu0 0.0
        %777 = vmatpush.msra.mxu0 0.0
        %778 = vmatpush.msra.mxu0 0.0
        %779 = vmatpush.msra.mxu0 0.0
        %780 = vmatpush.msra.mxu0 0.0
        %781 = vmatpush.msra.mxu0 0.0
        %782 = vmatpush.msra.mxu0 0.0
        %783 = vmatpush.msra.mxu0 %v770
        %784 = vmatpush.msra.mxu0 %v757
        %785 = vmatpush.msra.mxu0 %v756
        %786 = vmatpush.msra.mxu0 %v755
        %787 = vmatpush.msra.mxu0 %v754
        %788 = vmatmul.f32.gmra.mxu0 %v767
        %v789 = vpop.f32.mrf.mxu0
        %v790 = vadd.f32 %v763, %v789
        %791 = vdwg.mxu0
        %792 = vst [vmem:[%s204] sm:$0xff] %v790
        %s793 = sand.u32 %s110, 1
        %s794 = scalar_lea.sflag [#allocation5], %s793
        %s795 = sand.u32 %s110, 1
        %s796 = smul.addr %s795, 8
        %s797 = scalar_lea.vmem [#allocation6], %s796
        // Predicated region
        $region41: #{tpu_custom_call.1} parent=31 // pred_check
          %p798 = pneg %p120
        $region42: #{tpu_custom_call.1} parent=31 // pred_check_branch
          %800 = sbr.rel (%p798) target = $region44
        $region43: #{tpu_custom_call.1} parent=31 // pred_region
          %802 = vsyncadd %s794, 0
          %s803 = smul.addr %s24, 2
          %s804 = sadd.s32 %s25, %s803
          %s805 = smul.addr %s804, 8
          %s806 = scalar_lea.hbm %s3, %s805
          %s808 = sshll.u32 %s797, 4
          %s809 = int_to_ptr.vmem [resolvable:$true] %s808
          %s810 = sshll.u32 %s806, 4
          %s811 = int_to_ptr.hbm [resolvable:$true] %s810
          %813 = dma.vmem_to_hbm [thread:$0]  %s809, 128, %s811, %s794
        $region44: #{tpu_custom_call.1} parent=31 // pred_fallthru
          _
      $region32: #{tpu_custom_call.1} parent=5 // pred_fallthru
        _
      %p814 = scmp.le.s32.totalorder 2, %s15
      // Predicated region
      $region45: #{tpu_custom_call.1} parent=5 // pred_check
        %p815 = pneg %p814
      $region46: #{tpu_custom_call.1} parent=5 // pred_check_branch
        %817 = sbr.rel (%p815) target = $region48
      $region47: #{tpu_custom_call.1} parent=5 // pred_region
        %s818 = ssub.s32 %s15, 2
        // Predicated region
        $region49: #{tpu_custom_call.1} parent=47 // pred_check
          %p819 = pneg %p126
        $region50: #{tpu_custom_call.1} parent=47 // pred_check_branch
          %821 = sbr.rel (%p819) target = $region52
        $region51: #{tpu_custom_call.1} parent=47 // pred_region
          %s822 = sand.u32 %s111, 1
          %s823 = scalar_lea.sflag [#allocation5], %s822
          %s824 = sand.u32 %s111, 1
          %s825 = smul.addr %s824, 8
          %s826 = scalar_lea.vmem [#allocation6], %s825
          %828 = dma.done %s823, 128
        $region52: #{tpu_custom_call.1} parent=47 // pred_fallthru
          _
      $region48: #{tpu_custom_call.1} parent=5 // pred_fallthru
        _
    $region6: #{tpu_custom_call.1} parent=1 // loop_footer
      %s19 = sadd.s32 1, %s15
    $region7: #{tpu_custom_call.1} parent=1 // loop_footer_branch
      %14 = sbr.rel target = $region3
    $region8: #{tpu_custom_call.1} parent=1 // loop_exit
      _
    %829 = vsyncpa [#allocation4], 1
    %s830 = scalar_lea.sflag [#allocation4], 1
    %831 = vsyncpa %s830, 1
    %832 = vsyncpa [#allocation5], 1
    %s833 = scalar_lea.sflag [#allocation5], 1
    %834 = vsyncpa %s833, 1

</llo_original>
